<compile_context>
chip_gen: v6e
topology: v6e:2x2x1
jax: 0.10.0
libtpu: 0.0.40
codegen_flags: <defaults>
</compile_context>

<pallas_src>
import functools

import jax
import jax.numpy as jnp
from jax.experimental import pallas as pl
from jax.experimental.pallas import tpu as pltpu


# ---------------------------------------------------------------------------
# glue: bilinear (align_corners=True) interpolation matrix, same as F.upsample
# ---------------------------------------------------------------------------
def _bilinear_matrix(out_size, in_size, dtype=jnp.float32):
    if out_size == 1:
        src = jnp.zeros((1,), jnp.float32)
    else:
        scale = (in_size - 1) / (out_size - 1)
        src = jnp.arange(out_size, dtype=jnp.float32) * scale
    lo = jnp.clip(jnp.floor(src).astype(jnp.int32), 0, in_size - 1)
    hi = jnp.clip(lo + 1, 0, in_size - 1)
    frac = src - lo.astype(jnp.float32)
    cols = jnp.arange(in_size)
    a = ((1.0 - frac)[:, None] * (cols[None, :] == lo[:, None]).astype(jnp.float32)
         + frac[:, None] * (cols[None, :] == hi[:, None]).astype(jnp.float32))
    return a.astype(dtype)


def _choose_row_tile(H):
    """Largest row tile (multiple of 8, <=128) that still gives >=2 grid steps."""
    if H % 8 != 0:
        return H
    for cand in (128, 64, 32, 16, 8):
        if H % cand == 0 and H // cand >= 2:
            return cand
    return H


def _vmem_limit_bytes(C, h, w, TH, W):
    blocks = (2 * (C * h * w * 2)      # pred block (bf16), double-buffered
              + 2 * (w * W * 2)        # awt (bf16)
              + 2 * (TH * h * 2)       # ah row tile (bf16)
              + 2 * (TH * W * 4)       # label row tile (int32)
              + 4 * (128 * 4))         # two (1,128) f32 outputs
    scratch = C * h * W * 4 + 2 * TH * W * 4
    live = 10 * TH * W * 4             # online-softmax live planes / spill slack
    est = blocks + scratch + live
    return int(min(max(2 * est, 32 * 1024 * 1024), 64 * 1024 * 1024))


# ---------------------------------------------------------------------------
# Pallas kernel: fused bilinear upsample + (weighted / ignore-index) softmax CE
# ---------------------------------------------------------------------------
def _fused_upsample_ce_kernel(pred_ref, awt_ref, ah_ref, lab_ref, cw_ref,
                              loss_ref, wsum_ref,
                              t_ref, acc_loss_ref, acc_w_ref,
                              *, num_classes, in_h, ignore_index):
    r = pl.program_id(2)

    @pl.when(r == 0)
    def _stage1_and_init():
        # Stage 1 (once per (branch, batch)): W-axis bilinear interpolation for
        # ALL classes in one MXU matmul (bf16 x bf16 -> f32).
        t_ref[...] = jnp.dot(pred_ref[...], awt_ref[...],
                             preferred_element_type=jnp.float32)
        acc_loss_ref[...] = jnp.zeros_like(acc_loss_ref)
        acc_w_ref[...] = jnp.zeros_like(acc_w_ref)

    ah_t = ah_ref[...].astype(jnp.float32)          # (TH, h)
    lab = lab_ref[...]                              # (TH, W) int32

    def upsample_class(c):
        # Stage 2: H-axis interpolation of one class on the current row tile.
        return jnp.dot(ah_t, t_ref[c * in_h:(c + 1) * in_h, :],
                       preferred_element_type=jnp.float32)

    # Online softmax streamed over classes: only O(1) (TH, W) planes live.
    up0 = upsample_class(0)
    m = up0
    sexp = jnp.ones_like(up0)
    is0 = lab == 0
    logit_y = jnp.where(is0, up0, 0.0)
    w_pix = jnp.where(is0, cw_ref[0], 0.0)
    for c in range(1, num_classes):
        upc = upsample_class(c)
        m_new = jnp.maximum(m, upc)
        sexp = sexp * jnp.exp(m - m_new) + jnp.exp(upc - m_new)
        m = m_new
        is_c = lab == c
        logit_y = jnp.where(is_c, upc, logit_y)
        w_pix = jnp.where(is_c, cw_ref[c], w_pix)

    # ignore_index (and any out-of-range label) contributes zero weight, matching
    # torch.nn.CrossEntropyLoss(weight=..., ignore_index=...) 'mean' semantics.
    w_pix = jnp.where(lab == ignore_index, 0.0, w_pix)
    ce = (m + jnp.log(sexp)) - logit_y

    # Elementwise accumulation only (no per-step cross-lane reduce / tiny store).
    acc_loss_ref[...] += w_pix * ce
    acc_w_ref[...] += w_pix

    @pl.when(r == pl.num_programs(2) - 1)
    def _finalize():
        loss_ref[...] = jnp.full(loss_ref.shape, jnp.sum(acc_loss_ref[...]),
                                 jnp.float32)
        wsum_ref[...] = jnp.full(wsum_ref.shape, jnp.sum(acc_w_ref[...]),
                                 jnp.float32)


def fused_upsample_cross_entropy_stack(pred_stack, label, class_weights,
                                       ignore_index):
    """pred_stack: (S, B, C, h, w).  Returns per-branch weighted-mean CE, (S,)."""
    S, B, C, h, w = pred_stack.shape
    H, W = int(label.shape[1]), int(label.shape[2])
    TH = _choose_row_tile(H)
    R = H // TH

    ah = _bilinear_matrix(H, h, jnp.bfloat16)          # (H, h)
    awt = _bilinear_matrix(W, w, jnp.bfloat16).T       # (w, W)
    pred2d = pred_stack.astype(jnp.bfloat16).reshape(S, B, C * h, w)

    kernel = functools.partial(_fused_upsample_ce_kernel,
                               num_classes=C, in_h=h, ignore_index=ignore_index)

    loss_out, wsum_out = pl.pallas_call(
        kernel,
        out_shape=(jax.ShapeDtypeStruct((S, B, 1, 128), jnp.float32),
                   jax.ShapeDtypeStruct((S, B, 1, 128), jnp.float32)),
        grid_spec=pltpu.PrefetchScalarGridSpec(
            num_scalar_prefetch=0,
            grid=(S, B, R),
            in_specs=[
                pl.BlockSpec((None, None, C * h, w), lambda s, b, r: (s, b, 0, 0)),
                pl.BlockSpec((w, W), lambda s, b, r: (0, 0)),
                pl.BlockSpec((TH, h), lambda s, b, r: (r, 0)),
                pl.BlockSpec((None, TH, W), lambda s, b, r: (b, r, 0)),
                pl.BlockSpec(memory_space=pltpu.MemorySpace.SMEM),
            ],
            out_specs=(
                pl.BlockSpec((None, None, 1, 128), lambda s, b, r: (s, b, 0, 0)),
                pl.BlockSpec((None, None, 1, 128), lambda s, b, r: (s, b, 0, 0)),
            ),
            scratch_shapes=[
                pltpu.VMEM((C * h, W), jnp.float32),   # stage-1 result per (s, b)
                pltpu.VMEM((TH, W), jnp.float32),      # loss accumulator
                pltpu.VMEM((TH, W), jnp.float32),      # weight accumulator
            ],
        ),
        compiler_params=pltpu.CompilerParams(
            dimension_semantics=("parallel", "parallel", "arbitrary"),
            vmem_limit_bytes=_vmem_limit_bytes(C, h, w, TH, W)),
    )(pred2d, awt, ah, label.astype(jnp.int32),
      class_weights.astype(jnp.float32))

    loss_sum = jnp.sum(loss_out[:, :, 0, 0], axis=1)   # (S,)
    w_sum = jnp.sum(wsum_out[:, :, 0, 0], axis=1)      # (S,)
    # NOTE: if every pixel is ignored this is 0/0 = NaN, matching PyTorch.
    return loss_sum / w_sum


# ---------------------------------------------------------------------------
# Module equivalent
# ---------------------------------------------------------------------------
class CriterionCrossEntropyEdgeParsingAL:
    def __init__(self, ignore_index=255):
        self.ignore_index = ignore_index

    def __call__(self, preds, target):
        parsing_lab, edge_lab = target
        parsing_lab = parsing_lab.astype(jnp.int32)
        edge_lab = edge_lab.astype(jnp.int32)

        # edge class weights from label statistics (original does this in numpy):
        # class 0 gets pos/(pos+neg), class 1 gets neg/(pos+neg).
        pos_num = jnp.sum(edge_lab == 1).astype(jnp.float32)
        neg_num = jnp.sum(edge_lab == 0).astype(jnp.float32)
        weight_pos = neg_num / (pos_num + neg_num)
        weight_neg = pos_num / (pos_num + neg_num)
        edge_weights = jnp.stack([weight_neg, weight_pos]).astype(jnp.float32)

        # Fuse the three parsing branches (shared label / weights) into a single
        # pallas_call when their shapes match (the common case).
        if preds[0].shape == preds[1].shape == preds[2].shape:
            c_parse = preds[0].shape[1]
            parse_w = jnp.ones((c_parse,), jnp.float32)
            stack = jnp.stack(preds[0:3], axis=0)
            pl_losses = fused_upsample_cross_entropy_stack(
                stack, parsing_lab, parse_w, self.ignore_index)
            loss0, loss1, loss2 = pl_losses[0], pl_losses[1], pl_losses[2]
        else:
            parse_losses = []
            for p in preds[0:3]:
                pw = jnp.ones((p.shape[1],), jnp.float32)
                parse_losses.append(fused_upsample_cross_entropy_stack(
                    p[None], parsing_lab, pw, self.ignore_index)[0])
            loss0, loss1, loss2 = parse_losses

        # edge branch: F.cross_entropy default ignore_index is -100
        loss3 = fused_upsample_cross_entropy_stack(
            preds[3][None], edge_lab, edge_weights, -100)[0]

        return loss0 + loss1 + 0.4 * loss2 + loss3


# ---------------------------------------------------------------------------
# Pure-JAX reference (for correctness check only; uses the same bf16-cast inputs)
# ---------------------------------------------------------------------------
def _ref_upsample(x, H, W):
    _, _, h, w = x.shape
    ah = _bilinear_matrix(H, h, jnp.bfloat16).astype(jnp.float32)
    aw = _bilinear_matrix(W, w, jnp.bfloat16).astype(jnp.float32)
    xb = x.astype(jnp.bfloat16).astype(jnp.float32)
    return jnp.einsum('Hh,bchw,Ww->bcHW', ah, xb, aw)


def _ref_ce(logits, labels, weights, ignore_index):
    C = logits.shape[1]
    lse = jax.nn.logsumexp(logits, axis=1)
    labc = jnp.clip(labels, 0, C - 1)
    logit_y = jnp.take_along_axis(logits, labc[:, None], axis=1)[:, 0]
    valid = (labels >= 0) & (labels < C) & (labels != ignore_index)
    w = jnp.where(valid, weights[labc], 0.0)
    return jnp.sum(w * (lse - logit_y)) / jnp.sum(w)


def _ref_total(preds, target, ignore_index=255):
    parsing_lab, edge_lab = target
    H, W = parsing_lab.shape[1], parsing_lab.shape[2]
    pos = jnp.sum(edge_lab == 1).astype(jnp.float32)
    neg = jnp.sum(edge_lab == 0).astype(jnp.float32)
    ew = jnp.stack([pos / (pos + neg), neg / (pos + neg)])
    pw = jnp.ones((preds[0].shape[1],), jnp.float32)
    l0 = _ref_ce(_ref_upsample(preds[0], H, W), parsing_lab, pw, ignore_index)
    l1 = _ref_ce(_ref_upsample(preds[1], H, W), parsing_lab, pw, ignore_index)
    l2 = _ref_ce(_ref_upsample(preds[2], H, W), parsing_lab, pw, ignore_index)
    l3 = _ref_ce(_ref_upsample(preds[3], H, W), edge_lab, ew, -100)
    return l0 + l1 + 0.4 * l2 + l3


if __name__ == "__main__":
    key = jax.random.PRNGKey(0)
    B, C_PARSE, C_EDGE = 2, 4, 2
    h_in = w_in = 8
    H = W = 16

    k = jax.random.split(key, 6)
    pred0 = jax.random.normal(k[0], (B, C_PARSE, h_in, w_in), jnp.float32)
    pred1 = jax.random.normal(k[1], (B, C_PARSE, h_in, w_in), jnp.float32)
    pred2 = jax.random.normal(k[2], (B, C_PARSE, h_in, w_in), jnp.float32)
    pred3 = jax.random.normal(k[3], (B, C_EDGE, h_in, w_in), jnp.float32)

    raw = jax.random.randint(k[4], (B, H, W), 0, C_PARSE + 1)
    parsing_lab = jnp.where(raw == C_PARSE, 255, raw).astype(jnp.int32)  # some 255
    edge_lab = jax.random.randint(k[5], (B, H, W), 0, 2).astype(jnp.int32)

    preds = (pred0, pred1, pred2, pred3)
    target = (parsing_lab, edge_lab)

    criterion = CriterionCrossEntropyEdgeParsingAL(ignore_index=255)
    total = jax.block_until_ready(criterion(preds, target))

    ref = jax.block_until_ready(_ref_total(preds, target, 255))
    assert jnp.allclose(total, ref, rtol=1e-4, atol=1e-4), (total, ref)

    print("KERNEL_OK")
</pallas_src>

<mosaic_0001>
module attributes {stable_mosaic.version = 11 : i64} {
  func.func @_fused_upsample_ce_kernel(%arg0: i32, %arg1: i32, %arg2: i32, %arg3: memref<1x1x32x8xbf16, #tpu.memory_space<vmem>>, %arg4: memref<8x16xbf16, #tpu.memory_space<vmem>>, %arg5: memref<8x8xbf16, #tpu.memory_space<vmem>>, %arg6: memref<1x8x16xi32, #tpu.memory_space<vmem>>, %arg7: memref<4xf32, #tpu.memory_space<smem>>, %arg8: memref<1x1x1x128xf32, #tpu.memory_space<vmem>>, %arg9: memref<1x1x1x128xf32, #tpu.memory_space<vmem>>, %arg10: memref<32x16xf32, #tpu.memory_space<vmem>>, %arg11: memref<8x16xf32, #tpu.memory_space<vmem>>, %arg12: memref<8x16xf32, #tpu.memory_space<vmem>>) attributes {dimension_semantics = [#tpu.dimension_semantics<parallel>, #tpu.dimension_semantics<parallel>, #tpu.dimension_semantics<arbitrary>], iteration_bounds = array<i64: 3, 2, 2>, scalar_prefetch = 0 : i64, scratch_operands = 3 : i64, tpu.core_type = #tpu.core_type<tc>, window_params = [{transform_indices = @transform_0, window_bounds = array<i64: 1, 1, 32, 8>}, {pipeline_mode = #tpu.pipeline_mode<synchronous>, transform_indices = @transform_1, window_bounds = array<i64: 8, 16>}, {transform_indices = @transform_2, window_bounds = array<i64: 8, 8>}, {transform_indices = @transform_3, window_bounds = array<i64: 1, 8, 16>}, {transform_indices = @transform_4, window_bounds = array<i64: 4>}, {transform_indices = @transform_5, window_bounds = array<i64: 1, 1, 1, 128>}, {transform_indices = @transform_6, window_bounds = array<i64: 1, 1, 1, 128>}]} {
    %c0_i32 = arith.constant 0 : i32
    %0 = arith.cmpi eq, %arg2, %c0_i32 : i32
    %1 = arith.extui %0 : i1 to i32
    %c0_i32_0 = arith.constant 0 : i32
    %2 = arith.cmpi ne, %1, %c0_i32_0 : i32
    scf.if %2 {
      %c0_29 = arith.constant 0 : index
      %c0_30 = arith.constant 0 : index
      %c0_31 = arith.constant 0 : index
      %c0_32 = arith.constant 0 : index
      %80 = vector.load %arg3[%c0_29, %c0_30, %c0_31, %c0_32] : memref<1x1x32x8xbf16, #tpu.memory_space<vmem>>, vector<1x1x32x8xbf16>
      %81 = vector.shape_cast %80 : vector<1x1x32x8xbf16> to vector<32x8xbf16>
      %c0_33 = arith.constant 0 : index
      %c0_34 = arith.constant 0 : index
      %82 = vector.load %arg4[%c0_33, %c0_34] : memref<8x16xbf16, #tpu.memory_space<vmem>>, vector<8x16xbf16>
      %cst_35 = arith.constant dense<0.000000e+00> : vector<32x16xf32>
      %83 = tpu.matmul %81, %82, %cst_35 {dimension_numbers = #tpu.dot_dimension_numbers<[1], [0], [0], [1], [0, 0, 1, 1], [], []>} : vector<32x8xbf16>, vector<8x16xbf16>, vector<32x16xf32> -> vector<32x16xf32>
      %c0_36 = arith.constant 0 : index
      %c0_37 = arith.constant 0 : index
      %84 = vector.load %arg10[%c0_36, %c0_37] : memref<32x16xf32, #tpu.memory_space<vmem>>, vector<32x16xf32>
      tpu.vector_store %arg10[%c0_36, %c0_37], %83 {strides = array<i32>} : memref<32x16xf32, #tpu.memory_space<vmem>>, vector<32x16xf32>,
      %cst_38 = arith.constant 0.000000e+00 : f32
      %85 = vector.broadcast %cst_38 : f32 to vector<8x16xf32>
      %c0_39 = arith.constant 0 : index
      %c0_40 = arith.constant 0 : index
      %86 = vector.load %arg11[%c0_39, %c0_40] : memref<8x16xf32, #tpu.memory_space<vmem>>, vector<8x16xf32>
      tpu.vector_store %arg11[%c0_39, %c0_40], %85 {strides = array<i32>} : memref<8x16xf32, #tpu.memory_space<vmem>>, vector<8x16xf32>,
      %cst_41 = arith.constant 0.000000e+00 : f32
      %87 = vector.broadcast %cst_41 : f32 to vector<8x16xf32>
      %c0_42 = arith.constant 0 : index
      %c0_43 = arith.constant 0 : index
      %88 = vector.load %arg12[%c0_42, %c0_43] : memref<8x16xf32, #tpu.memory_space<vmem>>, vector<8x16xf32>
      tpu.vector_store %arg12[%c0_42, %c0_43], %87 {strides = array<i32>} : memref<8x16xf32, #tpu.memory_space<vmem>>, vector<8x16xf32>,
    } else {
    }
    %c0 = arith.constant 0 : index
    %c0_1 = arith.constant 0 : index
    %3 = vector.load %arg5[%c0, %c0_1] : memref<8x8xbf16, #tpu.memory_space<vmem>>, vector<8x8xbf16>
    %4 = arith.extf %3 : vector<8x8xbf16> to vector<8x8xf32>
    %c0_2 = arith.constant 0 : index
    %c0_3 = arith.constant 0 : index
    %c0_4 = arith.constant 0 : index
    %5 = vector.load %arg6[%c0_2, %c0_3, %c0_4] : memref<1x8x16xi32, #tpu.memory_space<vmem>>, vector<1x8x16xi32>
    %6 = vector.shape_cast %5 : vector<1x8x16xi32> to vector<8x16xi32>
    %c0_5 = arith.constant 0 : index
    %c0_6 = arith.constant 0 : index
    %7 = vector.load %arg10[%c0_5, %c0_6] : memref<32x16xf32, #tpu.memory_space<vmem>>, vector<8x16xf32>
    %cst = arith.constant dense<0.000000e+00> : vector<8x16xf32>
    %8 = tpu.matmul %4, %7, %cst {dimension_numbers = #tpu.dot_dimension_numbers<[1], [0], [0], [1], [0, 0, 1, 1], [], []>} : vector<8x8xf32>, vector<8x16xf32>, vector<8x16xf32> -> vector<8x16xf32>
    %cst_7 = arith.constant 1.000000e+00 : f32
    %9 = vector.broadcast %cst_7 : f32 to vector<8x16xf32>
    %c0_i32_8 = arith.constant 0 : i32
    %10 = vector.broadcast %c0_i32_8 : i32 to vector<8x16xi32>
    %11 = arith.cmpi eq, %6, %10 : vector<8x16xi32>
    %cst_9 = arith.constant 0.000000e+00 : f32
    %12 = vector.broadcast %cst_9 : f32 to vector<8x16xf32>
    %13 = arith.select %11, %8, %12 : vector<8x16xi1>, vector<8x16xf32>
    %c0_10 = arith.constant 0 : index
    %14 = memref.load %arg7[%c0_10] : memref<4xf32, #tpu.memory_space<smem>>
    %cst_11 = arith.constant 0.000000e+00 : f32
    %15 = vector.broadcast %14 : f32 to vector<8x16xf32>
    %16 = vector.broadcast %cst_11 : f32 to vector<8x16xf32>
    %17 = arith.select %11, %15, %16 : vector<8x16xi1>, vector<8x16xf32>
    %c8 = arith.constant 8 : index
    %c0_12 = arith.constant 0 : index
    %18 = vector.load %arg10[%c8, %c0_12] : memref<32x16xf32, #tpu.memory_space<vmem>>, vector<8x16xf32>
    %cst_13 = arith.constant dense<0.000000e+00> : vector<8x16xf32>
    %19 = tpu.matmul %4, %18, %cst_13 {dimension_numbers = #tpu.dot_dimension_numbers<[1], [0], [0], [1], [0, 0, 1, 1], [], []>} : vector<8x8xf32>, vector<8x16xf32>, vector<8x16xf32> -> vector<8x16xf32>
    %20 = arith.maximumf %8, %19 : vector<8x16xf32>
    %21 = arith.subf %8, %20 : vector<8x16xf32>
    %22 = math.exp %21 : vector<8x16xf32>
    %23 = arith.mulf %9, %22 : vector<8x16xf32>
    %24 = arith.subf %19, %20 : vector<8x16xf32>
    %25 = math.exp %24 : vector<8x16xf32>
    %26 = arith.addf %23, %25 : vector<8x16xf32>
    %c1_i32 = arith.constant 1 : i32
    %27 = vector.broadcast %c1_i32 : i32 to vector<8x16xi32>
    %28 = arith.cmpi eq, %6, %27 : vector<8x16xi32>
    %29 = arith.select %28, %19, %13 : vector<8x16xi1>, vector<8x16xf32>
    %c1 = arith.constant 1 : index
    %30 = memref.load %arg7[%c1] : memref<4xf32, #tpu.memory_space<smem>>
    %31 = vector.broadcast %30 : f32 to vector<8x16xf32>
    %32 = arith.select %28, %31, %17 : vector<8x16xi1>, vector<8x16xf32>
    %c16 = arith.constant 16 : index
    %c0_14 = arith.constant 0 : index
    %33 = vector.load %arg10[%c16, %c0_14] : memref<32x16xf32, #tpu.memory_space<vmem>>, vector<8x16xf32>
    %cst_15 = arith.constant dense<0.000000e+00> : vector<8x16xf32>
    %34 = tpu.matmul %4, %33, %cst_15 {dimension_numbers = #tpu.dot_dimension_numbers<[1], [0], [0], [1], [0, 0, 1, 1], [], []>} : vector<8x8xf32>, vector<8x16xf32>, vector<8x16xf32> -> vector<8x16xf32>
    %35 = arith.maximumf %20, %34 : vector<8x16xf32>
    %36 = arith.subf %20, %35 : vector<8x16xf32>
    %37 = math.exp %36 : vector<8x16xf32>
    %38 = arith.mulf %26, %37 : vector<8x16xf32>
    %39 = arith.subf %34, %35 : vector<8x16xf32>
    %40 = math.exp %39 : vector<8x16xf32>
    %41 = arith.addf %38, %40 : vector<8x16xf32>
    %c2_i32 = arith.constant 2 : i32
    %42 = vector.broadcast %c2_i32 : i32 to vector<8x16xi32>
    %43 = arith.cmpi eq, %6, %42 : vector<8x16xi32>
    %44 = arith.select %43, %34, %29 : vector<8x16xi1>, vector<8x16xf32>
    %c2 = arith.constant 2 : index
    %45 = memref.load %arg7[%c2] : memref<4xf32, #tpu.memory_space<smem>>
    %46 = vector.broadcast %45 : f32 to vector<8x16xf32>
    %47 = arith.select %43, %46, %32 : vector<8x16xi1>, vector<8x16xf32>
    %c24 = arith.constant 24 : index
    %c0_16 = arith.constant 0 : index
    %48 = vector.load %arg10[%c24, %c0_16] : memref<32x16xf32, #tpu.memory_space<vmem>>, vector<8x16xf32>
    %cst_17 = arith.constant dense<0.000000e+00> : vector<8x16xf32>
    %49 = tpu.matmul %4, %48, %cst_17 {dimension_numbers = #tpu.dot_dimension_numbers<[1], [0], [0], [1], [0, 0, 1, 1], [], []>} : vector<8x8xf32>, vector<8x16xf32>, vector<8x16xf32> -> vector<8x16xf32>
    %50 = arith.maximumf %35, %49 : vector<8x16xf32>
    %51 = arith.subf %35, %50 : vector<8x16xf32>
    %52 = math.exp %51 : vector<8x16xf32>
    %53 = arith.mulf %41, %52 : vector<8x16xf32>
    %54 = arith.subf %49, %50 : vector<8x16xf32>
    %55 = math.exp %54 : vector<8x16xf32>
    %56 = arith.addf %53, %55 : vector<8x16xf32>
    %c3_i32 = arith.constant 3 : i32
    %57 = vector.broadcast %c3_i32 : i32 to vector<8x16xi32>
    %58 = arith.cmpi eq, %6, %57 : vector<8x16xi32>
    %59 = arith.select %58, %49, %44 : vector<8x16xi1>, vector<8x16xf32>
    %c3 = arith.constant 3 : index
    %60 = memref.load %arg7[%c3] : memref<4xf32, #tpu.memory_space<smem>>
    %61 = vector.broadcast %60 : f32 to vector<8x16xf32>
    %62 = arith.select %58, %61, %47 : vector<8x16xi1>, vector<8x16xf32>
    %c255_i32 = arith.constant 255 : i32
    %63 = vector.broadcast %c255_i32 : i32 to vector<8x16xi32>
    %64 = arith.cmpi eq, %6, %63 : vector<8x16xi32>
    %cst_18 = arith.constant 0.000000e+00 : f32
    %65 = vector.broadcast %cst_18 : f32 to vector<8x16xf32>
    %66 = arith.select %64, %65, %62 : vector<8x16xi1>, vector<8x16xf32>
    %67 = math.log %56 : vector<8x16xf32>
    %68 = arith.addf %50, %67 : vector<8x16xf32>
    %69 = arith.subf %68, %59 : vector<8x16xf32>
    %c0_19 = arith.constant 0 : index
    %c0_20 = arith.constant 0 : index
    %70 = vector.load %arg11[%c0_19, %c0_20] : memref<8x16xf32, #tpu.memory_space<vmem>>, vector<8x16xf32>
    %71 = arith.mulf %66, %69 : vector<8x16xf32>
    %72 = arith.addf %70, %71 : vector<8x16xf32>
    %c0_21 = arith.constant 0 : index
    %c0_22 = arith.constant 0 : index
    %73 = vector.load %arg11[%c0_21, %c0_22] : memref<8x16xf32, #tpu.memory_space<vmem>>, vector<8x16xf32>
    tpu.vector_store %arg11[%c0_21, %c0_22], %72 {strides = array<i32>} : memref<8x16xf32, #tpu.memory_space<vmem>>, vector<8x16xf32>,
    %c0_23 = arith.constant 0 : index
    %c0_24 = arith.constant 0 : index
    %74 = vector.load %arg12[%c0_23, %c0_24] : memref<8x16xf32, #tpu.memory_space<vmem>>, vector<8x16xf32>
    %75 = arith.addf %74, %66 : vector<8x16xf32>
    %c0_25 = arith.constant 0 : index
    %c0_26 = arith.constant 0 : index
    %76 = vector.load %arg12[%c0_25, %c0_26] : memref<8x16xf32, #tpu.memory_space<vmem>>, vector<8x16xf32>
    tpu.vector_store %arg12[%c0_25, %c0_26], %75 {strides = array<i32>} : memref<8x16xf32, #tpu.memory_space<vmem>>, vector<8x16xf32>,
    %c1_i32_27 = arith.constant 1 : i32
    %77 = arith.cmpi eq, %arg2, %c1_i32_27 : i32
    %78 = arith.extui %77 : i1 to i32
    %c0_i32_28 = arith.constant 0 : i32
    %79 = arith.cmpi ne, %78, %c0_i32_28 : i32
    scf.if %79 {
      %c0_29 = arith.constant 0 : index
      %c0_30 = arith.constant 0 : index
      %80 = vector.load %arg11[%c0_29, %c0_30] : memref<8x16xf32, #tpu.memory_space<vmem>>, vector<8x16xf32>
      %81 = vector.shape_cast %80 : vector<8x16xf32> to vector<1x8x16xf32>
      %cst_31 = arith.constant dense<0.000000e+00> : vector<1xf32>
      %82 = vector.multi_reduction <add>, %81, %cst_31 [1, 2] : vector<1x8x16xf32> to vector<1xf32>
      %83 = vector.shape_cast %82 : vector<1xf32> to vector<1x1x1xf32>
      %84 = vector.extract %83[0, 0, 0] : f32 from vector<1x1x1xf32>
      %85 = vector.broadcast %84 : f32 to vector<1x128xf32>
      %c0_32 = arith.constant 0 : index
      %c0_33 = arith.constant 0 : index
      %c0_34 = arith.constant 0 : index
      %c0_35 = arith.constant 0 : index
      %86 = vector.load %arg8[%c0_32, %c0_33, %c0_34, %c0_35] : memref<1x1x1x128xf32, #tpu.memory_space<vmem>>, vector<1x1x1x128xf32>
      %87 = vector.shape_cast %86 : vector<1x1x1x128xf32> to vector<1x128xf32>
      %88 = vector.shape_cast %85 : vector<1x128xf32> to vector<1x1x1x128xf32>
      tpu.vector_store %arg8[%c0_32, %c0_33, %c0_34, %c0_35], %88 {strides = array<i32>} : memref<1x1x1x128xf32, #tpu.memory_space<vmem>>, vector<1x1x1x128xf32>,
      %c0_36 = arith.constant 0 : index
      %c0_37 = arith.constant 0 : index
      %89 = vector.load %arg12[%c0_36, %c0_37] : memref<8x16xf32, #tpu.memory_space<vmem>>, vector<8x16xf32>
      %90 = vector.shape_cast %89 : vector<8x16xf32> to vector<1x8x16xf32>
      %cst_38 = arith.constant dense<0.000000e+00> : vector<1xf32>
      %91 = vector.multi_reduction <add>, %90, %cst_38 [1, 2] : vector<1x8x16xf32> to vector<1xf32>
      %92 = vector.shape_cast %91 : vector<1xf32> to vector<1x1x1xf32>
      %93 = vector.extract %92[0, 0, 0] : f32 from vector<1x1x1xf32>
      %94 = vector.broadcast %93 : f32 to vector<1x128xf32>
      %c0_39 = arith.constant 0 : index
      %c0_40 = arith.constant 0 : index
      %c0_41 = arith.constant 0 : index
      %c0_42 = arith.constant 0 : index
      %95 = vector.load %arg9[%c0_39, %c0_40, %c0_41, %c0_42] : memref<1x1x1x128xf32, #tpu.memory_space<vmem>>, vector<1x1x1x128xf32>
      %96 = vector.shape_cast %95 : vector<1x1x1x128xf32> to vector<1x128xf32>
      %97 = vector.shape_cast %94 : vector<1x128xf32> to vector<1x1x1x128xf32>
      tpu.vector_store %arg9[%c0_39, %c0_40, %c0_41, %c0_42], %97 {strides = array<i32>} : memref<1x1x1x128xf32, #tpu.memory_space<vmem>>, vector<1x1x1x128xf32>,
    } else {
    }
    return
  }
  func.func @transform_0(%arg0: i32, %arg1: i32, %arg2: i32) -> (i32, i32, i32, i32) {
    %c0_i32 = arith.constant 0 : i32
    %c0_i32_0 = arith.constant 0 : i32
    %c0_i32_1 = arith.constant 0 : i32
    return %arg0, %arg1, %c0_i32, %c0_i32_0 : i32, i32, i32, i32
  }
  func.func @transform_1(%arg0: i32, %arg1: i32, %arg2: i32) -> (i32, i32) {
    %c0_i32 = arith.constant 0 : i32
    %c0_i32_0 = arith.constant 0 : i32
    %c0_i32_1 = arith.constant 0 : i32
    return %c0_i32, %c0_i32_0 : i32, i32
  }
  func.func @transform_2(%arg0: i32, %arg1: i32, %arg2: i32) -> (i32, i32) {
    %c0_i32 = arith.constant 0 : i32
    %c0_i32_0 = arith.constant 0 : i32
    return %arg2, %c0_i32 : i32, i32
  }
  func.func @transform_3(%arg0: i32, %arg1: i32, %arg2: i32) -> (i32, i32, i32) {
    %c0_i32 = arith.constant 0 : i32
    %c0_i32_0 = arith.constant 0 : i32
    return %arg1, %arg2, %c0_i32 : i32, i32, i32
  }
  func.func @transform_4(%arg0: i32, %arg1: i32, %arg2: i32) -> i32 {
    %c0_i32 = arith.constant 0 : i32
    %c0_i32_0 = arith.constant 0 : i32
    return %c0_i32 : i32
  }
  func.func @transform_5(%arg0: i32, %arg1: i32, %arg2: i32) -> (i32, i32, i32, i32) {
    %c0_i32 = arith.constant 0 : i32
    %c0_i32_0 = arith.constant 0 : i32
    %c0_i32_1 = arith.constant 0 : i32
    return %arg0, %arg1, %c0_i32, %c0_i32_0 : i32, i32, i32, i32
  }
  func.func @transform_6(%arg0: i32, %arg1: i32, %arg2: i32) -> (i32, i32, i32, i32) {
    %c0_i32 = arith.constant 0 : i32
    %c0_i32_0 = arith.constant 0 : i32
    %c0_i32_1 = arith.constant 0 : i32
    return %arg0, %arg1, %c0_i32, %c0_i32_0 : i32, i32, i32, i32
  }
}

</mosaic_0001>

<llo_original>
// kernel: tpu_custom_call.1
$region0: #{tpu_custom_call.1}
  #allocation0 [shape = 'u32[]', space=smem, size = 0x4, offset = 0x4, fixed_abs, tag = 'smem constant byte address 0x4 - core index']
  #allocation1 [shape = 'u32[144,128]{1,0:T(1,128)}', space=vmem, size = 0x12000, scoped, tag = 'internal scratch']
  #allocation2 [shape = 'f32[32,16]{1,0:T(8,128)}', space=vmem, size = 0x4000, scoped, tag = 'scratch operand']
  #allocation3 [shape = 'f32[8,16]{1,0:T(8,128)}', space=vmem, size = 0x1000, scoped, tag = 'scratch operand']
  #allocation4 [shape = 'f32[8,16]{1,0:T(8,128)}', space=vmem, size = 0x1000, scoped, tag = 'scratch operand']
  %s0 = inlined_call_operand.vmem [shape: bf16[3,2,32,8], index: 0, kind: input, shape index: {}]
  %s1 = inlined_call_operand.vmem [shape: bf16[8,16], index: 1, kind: input, shape index: {}]
  %s2 = inlined_call_operand.vmem [shape: bf16[16,8], index: 2, kind: input, shape index: {}]
  %s3 = inlined_call_operand.vmem [shape: s32[2,16,16], index: 3, kind: input, shape index: {}]
  %s4 = inlined_call_operand.vmem [shape: f32[4], index: 4, kind: input, shape index: {}]
  %s5 = inlined_call_operand.hbm [shape: f32[3,2,1,128], index: 5, kind: output, shape index: {0}]
  %s6 = inlined_call_operand.hbm [shape: f32[3,2,1,128], index: 6, kind: output, shape index: {1}]
  %7 = xla_tuple %s5, %s6
  %s8 = sld [smem:[#allocation0]]
  $region73: #{tpu_custom_call.1} parent=0
    _
  %s10 = ssub.s32 1, %s8
  %s11 = scalar_select 0, %s10, %s8
  $region1: #{tpu_custom_call.1} parent=0
    #allocation5 [shape = 'u8[512]{0}', space=smem, size = 0x200, scoped, tag = 'input window, operand 4, single buffered']
    #allocation6 [shape = 's32[2]{0}', space=sflag, size = 0x8, scoped, tag = 'scoped memory for tpu_custom_call.1']
    #allocation7 [shape = 's32[2]{0}', space=sflag, size = 0x8, scoped, tag = 'scoped memory for tpu_custom_call.1']
    #allocation8 [shape = 'u8[1024]{0}', space=vmem, size = 0x400, scoped, tag = 'output window, operand 0']
    #allocation9 [shape = 'u8[1024]{0}', space=vmem, size = 0x400, scoped, tag = 'output window, operand 1']
    #allocation10 [shape = 's32[2]{0}', space=sflag, size = 0x8, scoped, tag = 'scoped memory for tpu_custom_call.1']
    %12 = vsyncpa [#allocation7], 0
    %13 = vsyncpa [#allocation6], 0
    %s14 = scalar_lea.sflag [#allocation6], 1
    %15 = vsyncpa %s14, 0
    %16 = vsyncpa [#allocation10], 0
    %s17 = scalar_lea.sflag [#allocation10], 1
    %18 = vsyncpa %s17, 0
    loop: start=0, step=1, limit=14
    $region2: #{tpu_custom_call.1} parent=1 // loop_pre_header
      _
    $region3: #{tpu_custom_call.1} parent=1 // loop_header
      %s20 = sphi 0, %s24
      %p21 = scmp.ge.s32.totalorder %s20, 14
      %s27 = sphi 0, %s46
      %s28 = sphi 0, %s42
      %s29 = sphi 0, %s38
      %s30 = sphi 0, %s27
      %s31 = sphi 0, %s28
      %s32 = sphi 0, %s29
      %s33 = sphi 0, %s30
      %s34 = sphi 0, %s31
      %s35 = sphi 0, %s32
      %s51 = sphi 0, %s53
      %s54 = sphi 0, %s51
      %s55 = sphi 0, %s54
      %s71 = sphi 0, %s55
      %s75 = sphi 0, %s75
      %s77 = sphi 0, %s75
      %s78 = sphi 0, %s77
      %s92 = sphi 0, %s78
      %s98 = sphi 0, %s100
      %s101 = sphi 0, %s98
      %s102 = sphi 0, %s101
      %s118 = sphi 0, %s102
      %s126 = sphi 0, %s128
      %s129 = sphi 0, %s126
      %s130 = sphi 0, %s129
      %s146 = sphi 0, %s130
      %s150 = sphi 0, %s150
      %s152 = sphi 0, %s150
      %s153 = sphi 0, %s152
      %s167 = sphi 0, %s153
      %s175 = sphi 0, %s177
      %s178 = sphi 0, %s175
      %s179 = sphi 0, %s178
      %s195 = sphi 0, %s179
      %s203 = sphi 0, %s205
      %s206 = sphi 0, %s203
      %s207 = sphi 0, %s206
      %s223 = sphi 0, %s207
    $region4: #{tpu_custom_call.1} parent=1 // loop_header_branch
      %23 = sbr.rel (%p21) target = $region8
    $region5: #{tpu_custom_call.1} parent=1 // loop_body
      %s25 = ssub.s32 %s20, 1
      %s26 = ssub.s32 %s20, 2
      %s36 = sadd.s32 1, %s29
      %p37 = scmp.ge.s32.totalorder %s36, 2
      %s38 = scalar_select %p37, 0, %s36
      %s39 = sadd.s32 1, %s28
      %s40 = scalar_select %p37, %s39, %s28
      %p41 = scmp.ge.s32.totalorder %s40, 2
      %s42 = scalar_select %p41, 0, %s40
      %s43 = sadd.s32 1, %s27
      %s44 = scalar_select %p41, %s43, %s27
      %p45 = scmp.ge.s32.totalorder %s44, 3
      %s46 = scalar_select %p45, 0, %s44
      %s47 = ssub.s32 %s27, %s46
      %s48 = ssub.s32 %s28, %s42
      %s49 = sor.u32 %s47, %s48
      %p50 = scmp.eq.s32.totalorder %s49, 0
      %s52 = sadd.s32 %s51, 1
      %s53 = scalar_select %p50, %s51, %s52
      %p56 = pneg %p50
      %p57 = scmp.eq.s32.totalorder %s20, 11
      %p58 = por %p56, %p57
      %p59 = scmp.ne.s32.totalorder %s51, %s54
      %p60 = scmp.eq.s32.totalorder %s20, 0
      %p61 = por %p59, %p60
      %p62 = scmp.ne.s32.totalorder %s51, %s54
      %p63 = scmp.eq.s32.totalorder %s25, 11
      %p64 = por %p62, %p63
      %p65 = scmp.ne.s32.totalorder %s54, %s55
      %p66 = scmp.eq.s32.totalorder %s25, 0
      %p67 = por %p65, %p66
      %p68 = scmp.ne.s32.totalorder %s54, %s55
      %p69 = scmp.eq.s32.totalorder %s26, 11
      %p70 = por %p68, %p69
      %p72 = scmp.ne.s32.totalorder %s55, %s71
      %p73 = scmp.eq.s32.totalorder %s26, 0
      %p74 = por %p72, %p73
      %s76 = sadd.s32 %s75, 1
      %p79 = scmp.eq.s32.totalorder %s20, 11
      %p80 = scmp.ne.s32.totalorder %s75, %s77
      %p81 = scmp.eq.s32.totalorder %s20, 0
      %p82 = por %p80, %p81
      %p83 = scmp.ne.s32.totalorder %s75, %s77
      %p84 = scmp.eq.s32.totalorder %s25, 11
      %p85 = por %p83, %p84
      %p86 = scmp.ne.s32.totalorder %s77, %s78
      %p87 = scmp.eq.s32.totalorder %s25, 0
      %p88 = por %p86, %p87
      %p89 = scmp.ne.s32.totalorder %s77, %s78
      %p90 = scmp.eq.s32.totalorder %s26, 11
      %p91 = por %p89, %p90
      %p93 = scmp.ne.s32.totalorder %s78, %s92
      %p94 = scmp.eq.s32.totalorder %s26, 0
      %p95 = por %p93, %p94
      %s96 = ssub.s32 %s29, %s38
      %p97 = scmp.eq.s32.totalorder %s96, 0
      %s99 = sadd.s32 %s98, 1
      %s100 = scalar_select %p97, %s98, %s99
      %p103 = pneg %p97
      %p104 = scmp.eq.s32.totalorder %s20, 11
      %p105 = por %p103, %p104
      %p106 = scmp.ne.s32.totalorder %s98, %s101
      %p107 = scmp.eq.s32.totalorder %s20, 0
      %p108 = por %p106, %p107
      %p109 = scmp.ne.s32.totalorder %s98, %s101
      %p110 = scmp.eq.s32.totalorder %s25, 11
      %p111 = por %p109, %p110
      %p112 = scmp.ne.s32.totalorder %s101, %s102
      %p113 = scmp.eq.s32.totalorder %s25, 0
      %p114 = por %p112, %p113
      %p115 = scmp.ne.s32.totalorder %s101, %s102
      %p116 = scmp.eq.s32.totalorder %s26, 11
      %p117 = por %p115, %p116
      %p119 = scmp.ne.s32.totalorder %s102, %s118
      %p120 = scmp.eq.s32.totalorder %s26, 0
      %p121 = por %p119, %p120
      %s122 = ssub.s32 %s28, %s42
      %s123 = ssub.s32 %s29, %s38
      %s124 = sor.u32 %s122, %s123
      %p125 = scmp.eq.s32.totalorder %s124, 0
      %s127 = sadd.s32 %s126, 1
      %s128 = scalar_select %p125, %s126, %s127
      %p131 = pneg %p125
      %p132 = scmp.eq.s32.totalorder %s20, 11
      %p133 = por %p131, %p132
      %p134 = scmp.ne.s32.totalorder %s126, %s129
      %p135 = scmp.eq.s32.totalorder %s20, 0
      %p136 = por %p134, %p135
      %p137 = scmp.ne.s32.totalorder %s126, %s129
      %p138 = scmp.eq.s32.totalorder %s25, 11
      %p139 = por %p137, %p138
      %p140 = scmp.ne.s32.totalorder %s129, %s130
      %p141 = scmp.eq.s32.totalorder %s25, 0
      %p142 = por %p140, %p141
      %p143 = scmp.ne.s32.totalorder %s129, %s130
      %p144 = scmp.eq.s32.totalorder %s26, 11
      %p145 = por %p143, %p144
      %p147 = scmp.ne.s32.totalorder %s130, %s146
      %p148 = scmp.eq.s32.totalorder %s26, 0
      %p149 = por %p147, %p148
      %s151 = sadd.s32 %s150, 1
      %p154 = scmp.eq.s32.totalorder %s20, 11
      %p155 = scmp.ne.s32.totalorder %s150, %s152
      %p156 = scmp.eq.s32.totalorder %s20, 0
      %p157 = por %p155, %p156
      %p158 = scmp.ne.s32.totalorder %s150, %s152
      %p159 = scmp.eq.s32.totalorder %s25, 11
      %p160 = por %p158, %p159
      %p161 = scmp.ne.s32.totalorder %s152, %s153
      %p162 = scmp.eq.s32.totalorder %s25, 0
      %p163 = por %p161, %p162
      %p164 = scmp.ne.s32.totalorder %s152, %s153
      %p165 = scmp.eq.s32.totalorder %s26, 11
      %p166 = por %p164, %p165
      %p168 = scmp.ne.s32.totalorder %s153, %s167
      %p169 = scmp.eq.s32.totalorder %s26, 0
      %p170 = por %p168, %p169
      %s171 = ssub.s32 %s27, %s46
      %s172 = ssub.s32 %s28, %s42
      %s173 = sor.u32 %s171, %s172
      %p174 = scmp.eq.s32.totalorder %s173, 0
      %s176 = sadd.s32 %s175, 1
      %s177 = scalar_select %p174, %s175, %s176
      %p180 = pneg %p174
      %p181 = scmp.eq.s32.totalorder %s20, 11
      %p182 = por %p180, %p181
      %p183 = scmp.ne.s32.totalorder %s175, %s178
      %p184 = scmp.eq.s32.totalorder %s20, 0
      %p185 = por %p183, %p184
      %p186 = scmp.ne.s32.totalorder %s175, %s178
      %p187 = scmp.eq.s32.totalorder %s25, 11
      %p188 = por %p186, %p187
      %p189 = scmp.ne.s32.totalorder %s178, %s179
      %p190 = scmp.eq.s32.totalorder %s25, 0
      %p191 = por %p189, %p190
      %p192 = scmp.ne.s32.totalorder %s178, %s179
      %p193 = scmp.eq.s32.totalorder %s26, 11
      %p194 = por %p192, %p193
      %p196 = scmp.ne.s32.totalorder %s179, %s195
      %p197 = scmp.eq.s32.totalorder %s26, 0
      %p198 = por %p196, %p197
      %s199 = ssub.s32 %s27, %s46
      %s200 = ssub.s32 %s28, %s42
      %s201 = sor.u32 %s199, %s200
      %p202 = scmp.eq.s32.totalorder %s201, 0
      %s204 = sadd.s32 %s203, 1
      %s205 = scalar_select %p202, %s203, %s204
      %p208 = pneg %p202
      %p209 = scmp.eq.s32.totalorder %s20, 11
      %p210 = por %p208, %p209
      %p211 = scmp.ne.s32.totalorder %s203, %s206
      %p212 = scmp.eq.s32.totalorder %s20, 0
      %p213 = por %p211, %p212
      %p214 = scmp.ne.s32.totalorder %s203, %s206
      %p215 = scmp.eq.s32.totalorder %s25, 11
      %p216 = por %p214, %p215
      %p217 = scmp.ne.s32.totalorder %s206, %s207
      %p218 = scmp.eq.s32.totalorder %s25, 0
      %p219 = por %p217, %p218
      %p220 = scmp.ne.s32.totalorder %s206, %s207
      %p221 = scmp.eq.s32.totalorder %s26, 11
      %p222 = por %p220, %p221
      %p224 = scmp.ne.s32.totalorder %s207, %s223
      %p225 = scmp.eq.s32.totalorder %s26, 0
      %p226 = por %p224, %p225
      %p227 = scmp.le.s32.totalorder 1, %s20
      %p228 = scmp.lt.s32.totalorder %s20, 13
      %p229 = pnand %p227, %p228
      %p230 = pneg %p229
      // Predicated region
      $region9: #{tpu_custom_call.1} parent=5 // pred_check
        _
      $region10: #{tpu_custom_call.1} parent=5 // pred_check_branch
        %232 = sbr.rel (%p229) target = $region12
      $region11: #{tpu_custom_call.1} parent=5 // pred_region
        %s233 = ssub.s32 %s20, 1
        // Predicated region
        $region13: #{tpu_custom_call.1} parent=11 // pred_check
          %p234 = pneg %p88
        $region14: #{tpu_custom_call.1} parent=11 // pred_check_branch
          %236 = sbr.rel (%p234) target = $region16
        $region15: #{tpu_custom_call.1} parent=11 // pred_region
          _
        $region16: #{tpu_custom_call.1} parent=11 // pred_fallthru
          _
        // Predicated region
        $region17: #{tpu_custom_call.1} parent=11 // pred_check
          %p237 = pneg %p163
        $region18: #{tpu_custom_call.1} parent=11 // pred_check_branch
          %239 = sbr.rel (%p237) target = $region20
        $region19: #{tpu_custom_call.1} parent=11 // pred_region
          %s241 = ssub.s32 16, 16
          %242 = vsyncadd [#allocation7], %s241
          %s244 = sshll.u32 %s4, 4
          %s245 = int_to_ptr.vmem [resolvable:$true] %s244
          %247 = dma.vmem_to_smem %s245, 16, [#allocation5], [#allocation7]
        $region20: #{tpu_custom_call.1} parent=11 // pred_fallthru
          _
      $region12: #{tpu_custom_call.1} parent=5 // pred_fallthru
        _
      %p248 = scmp.lt.s32.totalorder %s20, 12
      // Predicated region
      $region21: #{tpu_custom_call.1} parent=5 // pred_check
        %p249 = pneg %p248
      $region22: #{tpu_custom_call.1} parent=5 // pred_check_branch
        %251 = sbr.rel (%p249) target = $region24
      $region23: #{tpu_custom_call.1} parent=5 // pred_region
        // Predicated region
        $region25: #{tpu_custom_call.1} parent=23 // pred_check
          %p252 = pneg %p61
        $region26: #{tpu_custom_call.1} parent=23 // pred_check_branch
          %254 = sbr.rel (%p252) target = $region28
        $region27: #{tpu_custom_call.1} parent=23 // pred_region
          %p255 = scmp.lt.s32.totalorder %s27, 2
          %s256 = scalar_select %p255, %s27, 2
          %p257 = scmp.lt.s32.totalorder %s28, 1
          %s258 = scalar_select %p257, %s28, 1
          %s259 = smul.addr %s258, 4
          %s260 = smul.addr %s256, 8
          %s261 = sadd.s32 %s259, %s260
          %s262 = smul.addr %s261, 4
          %s263 = scalar_lea.vmem %s0, %s262
        $region28: #{tpu_custom_call.1} parent=23 // pred_fallthru
          _
        // Predicated region
        $region29: #{tpu_custom_call.1} parent=23 // pred_check
          %p264 = pneg %p108
        $region30: #{tpu_custom_call.1} parent=23 // pred_check_branch
          %266 = sbr.rel (%p264) target = $region32
        $region31: #{tpu_custom_call.1} parent=23 // pred_region
          %p267 = scmp.lt.s32.totalorder %s29, 1
          %s268 = scalar_select %p267, %s29, 1
          %s269 = smul.addr %s268, 4
          %s270 = scalar_lea.vmem %s2, %s269
        $region32: #{tpu_custom_call.1} parent=23 // pred_fallthru
          _
        // Predicated region
        $region33: #{tpu_custom_call.1} parent=23 // pred_check
          %p271 = pneg %p136
        $region34: #{tpu_custom_call.1} parent=23 // pred_check_branch
          %273 = sbr.rel (%p271) target = $region36
        $region35: #{tpu_custom_call.1} parent=23 // pred_region
          %p274 = scmp.lt.s32.totalorder %s28, 1
          %s275 = scalar_select %p274, %s28, 1
          %p276 = scmp.lt.s32.totalorder %s29, 1
          %s277 = scalar_select %p276, %s29, 1
          %s278 = smul.addr %s275, 2
          %s279 = sadd.s32 %s277, %s278
          %s280 = smul.addr %s279, 8
          %s281 = scalar_lea.vmem %s3, %s280
        $region36: #{tpu_custom_call.1} parent=23 // pred_fallthru
          _
      $region24: #{tpu_custom_call.1} parent=5 // pred_fallthru
        _
      %p282 = scmp.le.s32.totalorder 1, %s20
      %p283 = scmp.lt.s32.totalorder %s20, 13
      %p284 = pnand %p282, %p283
      %p285 = pneg %p284
      // Predicated region
      $region37: #{tpu_custom_call.1} parent=5 // pred_check
        _
      $region38: #{tpu_custom_call.1} parent=5 // pred_check_branch
        %287 = sbr.rel (%p284) target = $region40
      $region39: #{tpu_custom_call.1} parent=5 // pred_region
        %s288 = ssub.s32 %s20, 1
        // Predicated region
        $region41: #{tpu_custom_call.1} parent=39 // pred_check
          %p289 = pneg %p163
        $region42: #{tpu_custom_call.1} parent=39 // pred_check_branch
          %291 = sbr.rel (%p289) target = $region44
        $region43: #{tpu_custom_call.1} parent=39 // pred_region
          %292 = dma.done [#allocation7], 16
        $region44: #{tpu_custom_call.1} parent=39 // pred_fallthru
          _
        %293 = sfence
        %p294 = scmp.lt.s32.totalorder %s30, 2
        %s295 = scalar_select %p294, %s30, 2
        %p296 = scmp.lt.s32.totalorder %s31, 1
        %s297 = scalar_select %p296, %s31, 1
        %s298 = smul.addr %s297, 4
        %s299 = smul.addr %s295, 8
        %s300 = sadd.s32 %s298, %s299
        %s301 = smul.addr %s300, 4
        %s302 = scalar_lea.vmem %s0, %s301
        %p303 = pneg %p67
        %p304 = pneg %p64
        %p305 = pneg %p88
        %p306 = pneg %p85
        %p307 = scmp.lt.s32.totalorder %s32, 1
        %s308 = scalar_select %p307, %s32, 1
        %s309 = smul.addr %s308, 4
        %s310 = scalar_lea.vmem %s2, %s309
        %p311 = pneg %p114
        %p312 = pneg %p111
        %p313 = scmp.lt.s32.totalorder %s31, 1
        %s314 = scalar_select %p313, %s31, 1
        %p315 = scmp.lt.s32.totalorder %s32, 1
        %s316 = scalar_select %p315, %s32, 1
        %s317 = smul.addr %s314, 2
        %s318 = sadd.s32 %s316, %s317
        %s319 = smul.addr %s318, 8
        %s320 = scalar_lea.vmem %s3, %s319
        %p321 = pneg %p142
        %p322 = pneg %p139
        %p323 = pneg %p163
        %p324 = pneg %p160
        %p325 = pneg %p191
        %p326 = pneg %p188
        %s327 = sand.u32 %s178, 1
        %s328 = scalar_lea.sflag [#allocation6], %s327
        %s329 = sand.u32 %s178, 1
        %s330 = scalar_lea.vmem [#allocation8], %s329
        %p331 = pneg %p219
        %p332 = pneg %p216
        %s333 = sand.u32 %s206, 1
        %s334 = scalar_lea.sflag [#allocation10], %s333
        %s335 = sand.u32 %s206, 1
        %s336 = scalar_lea.vmem [#allocation9], %s335
        %p337 = scmp.lt.s32.totalorder %s30, 2
        %s338 = scalar_select %p337, %s30, 2
        %p339 = scmp.lt.s32.totalorder %s31, 1
        %s340 = scalar_select %p339, %s31, 1
        %s341 = smul.addr %s340, 4
        %s342 = smul.addr %s338, 8
        %s343 = sadd.s32 %s341, %s342
        %s344 = smul.addr %s343, 4
        %s345 = scalar_lea.vmem %s0, %s344
        %p346 = scmp.lt.s32.totalorder %s32, 1
        %s347 = scalar_select %p346, %s32, 1
        %s348 = smul.addr %s347, 4
        %s349 = scalar_lea.vmem %s2, %s348
        %p350 = scmp.lt.s32.totalorder %s31, 1
        %s351 = scalar_select %p350, %s31, 1
        %p352 = scmp.lt.s32.totalorder %s32, 1
        %s353 = scalar_select %p352, %s32, 1
        %s354 = smul.addr %s351, 2
        %s355 = sadd.s32 %s353, %s354
        %s356 = smul.addr %s355, 8
        %s357 = scalar_lea.vmem %s3, %s356
        %p359 = scmp.eq.s32.totalorder %s32, 0
        // Predicated region
        $region45: #{tpu_custom_call.1} parent=39 // pred_check
          %p360 = pneg %p359
        $region46: #{tpu_custom_call.1} parent=39 // pred_check_branch
          %362 = sbr.rel (%p360) target = $region48
        $region47: #{tpu_custom_call.1} parent=39 // pred_region
          %v363 = vld [vmem:[%s345] sm:$0xf]
          %v364 = vld [vmem:[%s345 + $0x4] sm:$0xf]
          %v365 = vld [vmem:[%s345 + $0x8] sm:$0xf]
          %v366 = vld [vmem:[%s345 + $0xc] sm:$0xf]
          %v367 = vld [vmem:[%s1] sm:$0xf]
          %v372 = vunpack.c.l.b16 %v363
          %v373 = vunpack.c.l.b16 %v364
          %v374 = vunpack.c.l.b16 %v365
          %v375 = vunpack.c.l.b16 %v366
          %v376 = vpack.c.b16 %v373, %v372
          %v377 = vpack.c.b16 %v375, %v374
          %vm378 = vcmask 64512
          %v380 = vsel %vm378, %v376, 0
          %v383 = vsel %vm378, %v377, 0
          %vm385 = vcmask 1043456
          %v387 = vsel %vm385, %v367, 0
          %389 = vmatprep.subr.bf16.mxu0 0
          %390 = vmatpush1.bf16.msra.mxu0 0
          %391 = vmatprep.subr.bf16.mxu0 0
          %392 = vmatpush1.bf16.msra.mxu0 0
          %393 = vmatprep.subr.bf16.mxu0 0
          %394 = vmatpush1.bf16.msra.mxu0 0
          %395 = vmatprep.subr.bf16.mxu0 0
          %396 = vmatpush1.bf16.msra.mxu0 0
          %397 = vmatprep.subr.bf16.mxu0 0
          %398 = vmatpush1.bf16.msra.mxu0 0
          %399 = vmatprep.subr.bf16.mxu0 0
          %400 = vmatpush1.bf16.msra.mxu0 0
          %401 = vmatprep.subr.bf16.mxu0 0
          %402 = vmatpush1.bf16.msra.mxu0 0
          %403 = vmatprep.subr.bf16.mxu0 0
          %404 = vmatpush1.bf16.msra.mxu0 %v387
          %405 = vmatprep.subr.bf16.mxu0 0
          %406 = vmatpush2.bf16.msra.mxu0 0
          %407 = vmatprep.subr.bf16.mxu0 0
          %408 = vmatpush2.bf16.msra.mxu0 0
          %409 = vmatprep.subr.bf16.mxu0 0
          %410 = vmatpush2.bf16.msra.mxu0 0
          %411 = vmatprep.subr.bf16.mxu0 0
          %412 = vmatpush2.bf16.msra.mxu0 0
          %413 = vmatprep.subr.bf16.mxu0 0
          %414 = vmatpush2.bf16.msra.mxu0 0
          %415 = vmatprep.subr.bf16.mxu0 0
          %416 = vmatpush2.bf16.msra.mxu0 0
          %417 = vmatprep.subr.bf16.mxu0 0
          %418 = vmatpush2.bf16.msra.mxu0 0
          %419 = vmatprep.subr.bf16.mxu0 0
          %420 = vmatpush2.bf16.msra.mxu0 0
          %421 = vmatprep.mubr.bf16.mxu0 0
          %422 = vmatmul.mubr.bf16.gmra.mxu0 %v380
          %v423 = vpop.f32.mrf.mxu0
          %v424 = vadd.f32 0.0, %v423
          %v425 = vpop.f32.mrf.mxu0
          %v426 = vpop.f32.mrf.mxu0
          %v427 = vadd.f32 0.0, %v426
          %v428 = vpop.f32.mrf.mxu0
          %429 = vmatprep.mubr.bf16.mxu0 0
          %430 = vmatmul.mubr.bf16.gmra.mxu0 %v383
          %v431 = vpop.f32.mrf.mxu0
          %v432 = vadd.f32 0.0, %v431
          %v433 = vpop.f32.mrf.mxu0
          %v434 = vpop.f32.mrf.mxu0
          %v435 = vadd.f32 0.0, %v434
          %v436 = vpop.f32.mrf.mxu0
          %437 = vdwg.mxu0
          %vm438 = vcmask 130048
          %439 = vst.msk [vmem:[#allocation2] sm:$0xff] %vm438, %v424
          %440 = vst.msk [vmem:[#allocation2 + $0x8] sm:$0xff] %vm438, %v427
          %441 = vst.msk [vmem:[#allocation2 + $0x10] sm:$0xff] %vm438, %v432
          %442 = vst.msk [vmem:[#allocation2 + $0x18] sm:$0xff] %vm438, %v435
          %443 = vst.msk [vmem:[#allocation3] sm:$0xff] %vm438, 0.0
          %444 = vst.msk [vmem:[#allocation4] sm:$0xff] %vm438, 0.0
        $region48: #{tpu_custom_call.1} parent=39 // pred_fallthru
          _
        %v445 = vld [vmem:[%s349] sm:$0xf]
        %v446 = vunpack.c.l.bf16 %v445
        %v447 = vld [vmem:[%s357] sm:$0xff]
        %v448 = vld [vmem:[#allocation2] sm:$0xff]
        %vm449 = vcmask 64512
        %v451 = vsel %vm449, %v446, 0
        %453 = vmatprep.subr.mxu0 0.0
        %454 = vmatpush1.msra.mxu0 0.0
        %455 = vmatprep.subr.mxu0 0.0
        %456 = vmatpush1.msra.mxu0 0.0
        %457 = vmatprep.subr.mxu0 0.0
        %458 = vmatpush1.msra.mxu0 0.0
        %459 = vmatprep.subr.mxu0 0.0
        %460 = vmatpush1.msra.mxu0 0.0
        %461 = vmatprep.subr.mxu0 0.0
        %462 = vmatpush1.msra.mxu0 0.0
        %463 = vmatprep.subr.mxu0 0.0
        %464 = vmatpush1.msra.mxu0 0.0
        %465 = vmatprep.subr.mxu0 0.0
        %466 = vmatpush1.msra.mxu0 0.0
        %467 = vmatprep.subr.mxu0 0.0
        %468 = vmatpush1.msra.mxu0 0.0
        %469 = vmatprep.subr.mxu0 0.0
        %470 = vmatpush1.msra.mxu0 0.0
        %471 = vmatprep.subr.mxu0 0.0
        %472 = vmatpush1.msra.mxu0 0.0
        %473 = vmatprep.subr.mxu0 0.0
        %474 = vmatpush1.msra.mxu0 0.0
        %475 = vmatprep.subr.mxu0 0.0
        %476 = vmatpush1.msra.mxu0 0.0
        %477 = vmatprep.subr.mxu0 0.0
        %478 = vmatpush1.msra.mxu0 0.0
        %479 = vmatprep.subr.mxu0 0.0
        %480 = vmatpush1.msra.mxu0 0.0
        %481 = vmatprep.subr.mxu0 0.0
        %482 = vmatpush1.msra.mxu0 0.0
        %483 = vmatprep.subr.mxu0 0.0
        %484 = vmatpush1.msra.mxu0 %v448
        %485 = vmatprep.subr.mxu0 0.0
        %486 = vmatpush2.msra.mxu0 0.0
        %487 = vmatprep.subr.mxu0 0.0
        %488 = vmatpush2.msra.mxu0 0.0
        %489 = vmatprep.subr.mxu0 0.0
        %490 = vmatpush2.msra.mxu0 0.0
        %491 = vmatprep.subr.mxu0 0.0
        %492 = vmatpush2.msra.mxu0 0.0
        %493 = vmatprep.subr.mxu0 0.0
        %494 = vmatpush2.msra.mxu0 0.0
        %495 = vmatprep.subr.mxu0 0.0
        %496 = vmatpush2.msra.mxu0 0.0
        %497 = vmatprep.subr.mxu0 0.0
        %498 = vmatpush2.msra.mxu0 0.0
        %499 = vmatprep.subr.mxu0 0.0
        %500 = vmatpush2.msra.mxu0 0.0
        %501 = vmatprep.subr.mxu0 0.0
        %502 = vmatpush2.msra.mxu0 0.0
        %503 = vmatprep.subr.mxu0 0.0
        %504 = vmatpush2.msra.mxu0 0.0
        %505 = vmatprep.subr.mxu0 0.0
        %506 = vmatpush2.msra.mxu0 0.0
        %507 = vmatprep.subr.mxu0 0.0
        %508 = vmatpush2.msra.mxu0 0.0
        %509 = vmatprep.subr.mxu0 0.0
        %510 = vmatpush2.msra.mxu0 0.0
        %511 = vmatprep.subr.mxu0 0.0
        %512 = vmatpush2.msra.mxu0 0.0
        %513 = vmatprep.subr.mxu0 0.0
        %514 = vmatpush2.msra.mxu0 0.0
        %515 = vmatprep.subr.mxu0 0.0
        %516 = vmatpush2.msra.mxu0 0.0
        %517 = vmatprep.mubr.f32.mxu0 0.0
        %518 = vmatmul.mubr.f32.gmra.mxu0 %v451
        %v519 = vpop.f32.mrf.mxu0
        %v520 = vadd.f32 0.0, %v519
        %v521 = vpop.f32.mrf.mxu0
        %522 = vdwg.mxu0
        %vm523 = vcmp.eq.s32.totalorder %v447, 0
        %v524 = vsel %vm523, %v520, 0.0
        %s525 = sld [smem:[#allocation5]]
        %v526 = vstv %s525
        %v527 = vsel %vm523, %v526, 0.0
        %v528 = vld [vmem:[#allocation2 + $0x8] sm:$0xff]
        %529 = vmatprep.subr.mxu0 0.0
        %530 = vmatpush1.msra.mxu0 0.0
        %531 = vmatprep.subr.mxu0 0.0
        %532 = vmatpush1.msra.mxu0 0.0
        %533 = vmatprep.subr.mxu0 0.0
        %534 = vmatpush1.msra.mxu0 0.0
        %535 = vmatprep.subr.mxu0 0.0
        %536 = vmatpush1.msra.mxu0 0.0
        %537 = vmatprep.subr.mxu0 0.0
        %538 = vmatpush1.msra.mxu0 0.0
        %539 = vmatprep.subr.mxu0 0.0
        %540 = vmatpush1.msra.mxu0 0.0
        %541 = vmatprep.subr.mxu0 0.0
        %542 = vmatpush1.msra.mxu0 0.0
        %543 = vmatprep.subr.mxu0 0.0
        %544 = vmatpush1.msra.mxu0 0.0
        %545 = vmatprep.subr.mxu0 0.0
        %546 = vmatpush1.msra.mxu0 0.0
        %547 = vmatprep.subr.mxu0 0.0
        %548 = vmatpush1.msra.mxu0 0.0
        %549 = vmatprep.subr.mxu0 0.0
        %550 = vmatpush1.msra.mxu0 0.0
        %551 = vmatprep.subr.mxu0 0.0
        %552 = vmatpush1.msra.mxu0 0.0
        %553 = vmatprep.subr.mxu0 0.0
        %554 = vmatpush1.msra.mxu0 0.0
        %555 = vmatprep.subr.mxu0 0.0
        %556 = vmatpush1.msra.mxu0 0.0
        %557 = vmatprep.subr.mxu0 0.0
        %558 = vmatpush1.msra.mxu0 0.0
        %559 = vmatprep.subr.mxu0 0.0
        %560 = vmatpush1.msra.mxu0 %v528
        %561 = vmatprep.subr.mxu0 0.0
        %562 = vmatpush2.msra.mxu0 0.0
        %563 = vmatprep.subr.mxu0 0.0
        %564 = vmatpush2.msra.mxu0 0.0
        %565 = vmatprep.subr.mxu0 0.0
        %566 = vmatpush2.msra.mxu0 0.0
        %567 = vmatprep.subr.mxu0 0.0
        %568 = vmatpush2.msra.mxu0 0.0
        %569 = vmatprep.subr.mxu0 0.0
        %570 = vmatpush2.msra.mxu0 0.0
        %571 = vmatprep.subr.mxu0 0.0
        %572 = vmatpush2.msra.mxu0 0.0
        %573 = vmatprep.subr.mxu0 0.0
        %574 = vmatpush2.msra.mxu0 0.0
        %575 = vmatprep.subr.mxu0 0.0
        %576 = vmatpush2.msra.mxu0 0.0
        %577 = vmatprep.subr.mxu0 0.0
        %578 = vmatpush2.msra.mxu0 0.0
        %579 = vmatprep.subr.mxu0 0.0
        %580 = vmatpush2.msra.mxu0 0.0
        %581 = vmatprep.subr.mxu0 0.0
        %582 = vmatpush2.msra.mxu0 0.0
        %583 = vmatprep.subr.mxu0 0.0
        %584 = vmatpush2.msra.mxu0 0.0
        %585 = vmatprep.subr.mxu0 0.0
        %586 = vmatpush2.msra.mxu0 0.0
        %587 = vmatprep.subr.mxu0 0.0
        %588 = vmatpush2.msra.mxu0 0.0
        %589 = vmatprep.subr.mxu0 0.0
        %590 = vmatpush2.msra.mxu0 0.0
        %591 = vmatprep.subr.mxu0 0.0
        %592 = vmatpush2.msra.mxu0 0.0
        %593 = vmatprep.mubr.f32.mxu0 0.0
        %594 = vmatmul.mubr.f32.gmra.mxu0 %v451
        %v595 = vpop.f32.mrf.mxu0
        %v596 = vadd.f32 0.0, %v595
        %v597 = vpop.f32.mrf.mxu0
        %598 = vdwg.mxu0
        %v599 = vmax.f32 %v520, %v596
        %v600 = vsub.f32 %v520, %v599
        %v601 = vmul.f32 %v600, 1.442695
        %v602 = vpow.pop %v601
        %v603 = vsub.f32 %v596, %v599
        %v604 = vmul.f32 %v603, 1.442695
        %v605 = vpow.pop %v604
        %v606 = vadd.f32 %v602, %v605
        %vm607 = vcmp.eq.s32.totalorder %v447, 1
        %v608 = vsel %vm607, %v596, %v524
        %s609 = sld [smem:[#allocation5 + $0x1]]
        %v610 = vstv %s609
        %v611 = vsel %vm607, %v610, %v527
        %v612 = vld [vmem:[#allocation2 + $0x10] sm:$0xff]
        %613 = vmatprep.subr.mxu0 0.0
        %614 = vmatpush1.msra.mxu0 0.0
        %615 = vmatprep.subr.mxu0 0.0
        %616 = vmatpush1.msra.mxu0 0.0
        %617 = vmatprep.subr.mxu0 0.0
        %618 = vmatpush1.msra.mxu0 0.0
        %619 = vmatprep.subr.mxu0 0.0
        %620 = vmatpush1.msra.mxu0 0.0
        %621 = vmatprep.subr.mxu0 0.0
        %622 = vmatpush1.msra.mxu0 0.0
        %623 = vmatprep.subr.mxu0 0.0
        %624 = vmatpush1.msra.mxu0 0.0
        %625 = vmatprep.subr.mxu0 0.0
        %626 = vmatpush1.msra.mxu0 0.0
        %627 = vmatprep.subr.mxu0 0.0
        %628 = vmatpush1.msra.mxu0 0.0
        %629 = vmatprep.subr.mxu0 0.0
        %630 = vmatpush1.msra.mxu0 0.0
        %631 = vmatprep.subr.mxu0 0.0
        %632 = vmatpush1.msra.mxu0 0.0
        %633 = vmatprep.subr.mxu0 0.0
        %634 = vmatpush1.msra.mxu0 0.0
        %635 = vmatprep.subr.mxu0 0.0
        %636 = vmatpush1.msra.mxu0 0.0
        %637 = vmatprep.subr.mxu0 0.0
        %638 = vmatpush1.msra.mxu0 0.0
        %639 = vmatprep.subr.mxu0 0.0
        %640 = vmatpush1.msra.mxu0 0.0
        %641 = vmatprep.subr.mxu0 0.0
        %642 = vmatpush1.msra.mxu0 0.0
        %643 = vmatprep.subr.mxu0 0.0
        %644 = vmatpush1.msra.mxu0 %v612
        %645 = vmatprep.subr.mxu0 0.0
        %646 = vmatpush2.msra.mxu0 0.0
        %647 = vmatprep.subr.mxu0 0.0
        %648 = vmatpush2.msra.mxu0 0.0
        %649 = vmatprep.subr.mxu0 0.0
        %650 = vmatpush2.msra.mxu0 0.0
        %651 = vmatprep.subr.mxu0 0.0
        %652 = vmatpush2.msra.mxu0 0.0
        %653 = vmatprep.subr.mxu0 0.0
        %654 = vmatpush2.msra.mxu0 0.0
        %655 = vmatprep.subr.mxu0 0.0
        %656 = vmatpush2.msra.mxu0 0.0
        %657 = vmatprep.subr.mxu0 0.0
        %658 = vmatpush2.msra.mxu0 0.0
        %659 = vmatprep.subr.mxu0 0.0
        %660 = vmatpush2.msra.mxu0 0.0
        %661 = vmatprep.subr.mxu0 0.0
        %662 = vmatpush2.msra.mxu0 0.0
        %663 = vmatprep.subr.mxu0 0.0
        %664 = vmatpush2.msra.mxu0 0.0
        %665 = vmatprep.subr.mxu0 0.0
        %666 = vmatpush2.msra.mxu0 0.0
        %667 = vmatprep.subr.mxu0 0.0
        %668 = vmatpush2.msra.mxu0 0.0
        %669 = vmatprep.subr.mxu0 0.0
        %670 = vmatpush2.msra.mxu0 0.0
        %671 = vmatprep.subr.mxu0 0.0
        %672 = vmatpush2.msra.mxu0 0.0
        %673 = vmatprep.subr.mxu0 0.0
        %674 = vmatpush2.msra.mxu0 0.0
        %675 = vmatprep.subr.mxu0 0.0
        %676 = vmatpush2.msra.mxu0 0.0
        %677 = vmatprep.mubr.f32.mxu0 0.0
        %678 = vmatmul.mubr.f32.gmra.mxu0 %v451
        %v679 = vpop.f32.mrf.mxu0
        %v680 = vadd.f32 0.0, %v679
        %v681 = vpop.f32.mrf.mxu0
        %682 = vdwg.mxu0
        %v683 = vmax.f32 %v599, %v680
        %v684 = vsub.f32 %v599, %v683
        %v685 = vmul.f32 %v684, 1.442695
        %v686 = vpow.pop %v685
        %v687 = vmul.f32 %v606, %v686
        %v688 = vsub.f32 %v680, %v683
        %v689 = vmul.f32 %v688, 1.442695
        %v690 = vpow.pop %v689
        %v691 = vadd.f32 %v687, %v690
        %vm692 = vcmp.eq.s32.totalorder %v447, 2
        %v693 = vsel %vm692, %v680, %v608
        %s694 = sld [smem:[#allocation5 + $0x2]]
        %v695 = vstv %s694
        %v696 = vsel %vm692, %v695, %v611
        %v697 = vld [vmem:[#allocation2 + $0x18] sm:$0xff]
        %698 = vmatprep.subr.mxu0 0.0
        %699 = vmatpush1.msra.mxu0 0.0
        %700 = vmatprep.subr.mxu0 0.0
        %701 = vmatpush1.msra.mxu0 0.0
        %702 = vmatprep.subr.mxu0 0.0
        %703 = vmatpush1.msra.mxu0 0.0
        %704 = vmatprep.subr.mxu0 0.0
        %705 = vmatpush1.msra.mxu0 0.0
        %706 = vmatprep.subr.mxu0 0.0
        %707 = vmatpush1.msra.mxu0 0.0
        %708 = vmatprep.subr.mxu0 0.0
        %709 = vmatpush1.msra.mxu0 0.0
        %710 = vmatprep.subr.mxu0 0.0
        %711 = vmatpush1.msra.mxu0 0.0
        %712 = vmatprep.subr.mxu0 0.0
        %713 = vmatpush1.msra.mxu0 0.0
        %714 = vmatprep.subr.mxu0 0.0
        %715 = vmatpush1.msra.mxu0 0.0
        %716 = vmatprep.subr.mxu0 0.0
        %717 = vmatpush1.msra.mxu0 0.0
        %718 = vmatprep.subr.mxu0 0.0
        %719 = vmatpush1.msra.mxu0 0.0
        %720 = vmatprep.subr.mxu0 0.0
        %721 = vmatpush1.msra.mxu0 0.0
        %722 = vmatprep.subr.mxu0 0.0
        %723 = vmatpush1.msra.mxu0 0.0
        %724 = vmatprep.subr.mxu0 0.0
        %725 = vmatpush1.msra.mxu0 0.0
        %726 = vmatprep.subr.mxu0 0.0
        %727 = vmatpush1.msra.mxu0 0.0
        %728 = vmatprep.subr.mxu0 0.0
        %729 = vmatpush1.msra.mxu0 %v697
        %730 = vmatprep.subr.mxu0 0.0
        %731 = vmatpush2.msra.mxu0 0.0
        %732 = vmatprep.subr.mxu0 0.0
        %733 = vmatpush2.msra.mxu0 0.0
        %734 = vmatprep.subr.mxu0 0.0
        %735 = vmatpush2.msra.mxu0 0.0
        %736 = vmatprep.subr.mxu0 0.0
        %737 = vmatpush2.msra.mxu0 0.0
        %738 = vmatprep.subr.mxu0 0.0
        %739 = vmatpush2.msra.mxu0 0.0
        %740 = vmatprep.subr.mxu0 0.0
        %741 = vmatpush2.msra.mxu0 0.0
        %742 = vmatprep.subr.mxu0 0.0
        %743 = vmatpush2.msra.mxu0 0.0
        %744 = vmatprep.subr.mxu0 0.0
        %745 = vmatpush2.msra.mxu0 0.0
        %746 = vmatprep.subr.mxu0 0.0
        %747 = vmatpush2.msra.mxu0 0.0
        %748 = vmatprep.subr.mxu0 0.0
        %749 = vmatpush2.msra.mxu0 0.0
        %750 = vmatprep.subr.mxu0 0.0
        %751 = vmatpush2.msra.mxu0 0.0
        %752 = vmatprep.subr.mxu0 0.0
        %753 = vmatpush2.msra.mxu0 0.0
        %754 = vmatprep.subr.mxu0 0.0
        %755 = vmatpush2.msra.mxu0 0.0
        %756 = vmatprep.subr.mxu0 0.0
        %757 = vmatpush2.msra.mxu0 0.0
        %758 = vmatprep.subr.mxu0 0.0
        %759 = vmatpush2.msra.mxu0 0.0
        %760 = vmatprep.subr.mxu0 0.0
        %761 = vmatpush2.msra.mxu0 0.0
        %762 = vmatprep.mubr.f32.mxu0 0.0
        %763 = vmatmul.mubr.f32.gmra.mxu0 %v451
        %v764 = vpop.f32.mrf.mxu0
        %v765 = vadd.f32 0.0, %v764
        %v766 = vpop.f32.mrf.mxu0
        %767 = vdwg.mxu0
        %v768 = vmax.f32 %v683, %v765
        %v769 = vsub.f32 %v683, %v768
        %v770 = vmul.f32 %v769, 1.442695
        %v771 = vpow.pop %v770
        %v772 = vmul.f32 %v691, %v771
        %v773 = vsub.f32 %v765, %v768
        %v774 = vmul.f32 %v773, 1.442695
        %v775 = vpow.pop %v774
        %v776 = vadd.f32 %v772, %v775
        %vm777 = vcmp.eq.s32.totalorder %v447, 3
        %v778 = vsel %vm777, %v765, %v693
        %s779 = sld [smem:[#allocation5 + $0x3]]
        %v780 = vstv %s779
        %v781 = vsel %vm777, %v780, %v696
        %vm782 = vcmp.eq.s32.totalorder %v447, 255
        %v783 = vsel %vm782, 0.0, %v781
        %v784 = vlog2.pop %v776
        %v785 = vmul.f32 %v784, 0.6931472
        %v786 = vadd.f32 %v768, %v785
        %v787 = vsub.f32 %v786, %v778
        %v788 = vld [vmem:[#allocation3] sm:$0xff]
        %v789 = vmul.f32 %v783, %v787
        %v790 = vadd.f32 %v788, %v789
        %vm791 = vcmask 130048
        %792 = vst.msk [vmem:[#allocation3] sm:$0xff] %vm791, %v790
        %v793 = vld [vmem:[#allocation4] sm:$0xff]
        %v794 = vadd.f32 %v793, %v783
        %795 = vst.msk [vmem:[#allocation4] sm:$0xff] %vm791, %v794
        %p796 = scmp.eq.s32.totalorder %s32, 1
        // Predicated region
        $region49: #{tpu_custom_call.1} parent=39 // pred_check
          %p797 = pneg %p796
        $region50: #{tpu_custom_call.1} parent=39 // pred_check_branch
          %799 = sbr.rel (%p797) target = $region52
        $region51: #{tpu_custom_call.1} parent=39 // pred_region
          %v800 = vld [vmem:[#allocation3] sm:$0xff]
          %v801 = vsel %vm791, %v800, 0.0
          %802 = vadd.xlane.f32.xlu0 %v801
          %v803 = vpop.xlane.xlu0 %802
          %v804 = vrot.slane %v803, 4
          %v805 = vadd.f32 %v803, %v804
          %v806 = vrot.slane %v805, 2
          %v807 = vadd.f32 %v805, %v806
          %v808 = vrot.slane %v807, 1
          %v809 = vadd.f32 %v807, %v808
          %s810 = vtos %v809
          %v811 = vstv %s810
          %812 = vst [vmem:[%s330] sm:$0x1] %v811
          %v813 = vld [vmem:[#allocation4] sm:$0xff]
          %v814 = vsel %vm791, %v813, 0.0
          %815 = vadd.xlane.f32.xlu0 %v814
          %v816 = vpop.xlane.xlu0 %815
          %v817 = vrot.slane %v816, 4
          %v818 = vadd.f32 %v816, %v817
          %v819 = vrot.slane %v818, 2
          %v820 = vadd.f32 %v818, %v819
          %v821 = vrot.slane %v820, 1
          %v822 = vadd.f32 %v820, %v821
          %s823 = vtos %v822
          %v824 = vstv %s823
          %825 = vst [vmem:[%s336] sm:$0x1] %v824
        $region52: #{tpu_custom_call.1} parent=39 // pred_fallthru
          _
        %s826 = sand.u32 %s178, 1
        %s827 = scalar_lea.sflag [#allocation6], %s826
        %s828 = sand.u32 %s178, 1
        %s829 = scalar_lea.vmem [#allocation8], %s828
        %s830 = sand.u32 %s206, 1
        %s831 = scalar_lea.sflag [#allocation10], %s830
        %s832 = sand.u32 %s206, 1
        %s833 = scalar_lea.vmem [#allocation9], %s832
        // Predicated region
        $region53: #{tpu_custom_call.1} parent=39 // pred_check
          %p834 = pneg %p188
        $region54: #{tpu_custom_call.1} parent=39 // pred_check_branch
          %836 = sbr.rel (%p834) target = $region56
        $region55: #{tpu_custom_call.1} parent=39 // pred_region
          %s838 = ssub.s32 16, 16
          %839 = vsyncadd %s827, %s838
          %s840 = smul.addr %s30, 2
          %s841 = sadd.s32 %s31, %s840
          %s842 = smul.addr %s841, 16
          %s843 = scalar_lea.hbm %s5, %s842
          %s845 = sshll.u32 %s829, 4
          %s846 = int_to_ptr.vmem [resolvable:$true] %s845
          %848 = dma.vmem_to_hbm [thread:$0]  %s846, 16, %s843, %s827
        $region56: #{tpu_custom_call.1} parent=39 // pred_fallthru
          _
        // Predicated region
        $region57: #{tpu_custom_call.1} parent=39 // pred_check
          %p849 = pneg %p216
        $region58: #{tpu_custom_call.1} parent=39 // pred_check_branch
          %851 = sbr.rel (%p849) target = $region60
        $region59: #{tpu_custom_call.1} parent=39 // pred_region
          %s853 = ssub.s32 16, 16
          %854 = vsyncadd %s831, %s853
          %s855 = smul.addr %s30, 2
          %s856 = sadd.s32 %s31, %s855
          %s857 = smul.addr %s856, 16
          %s858 = scalar_lea.hbm %s6, %s857
          %s860 = sshll.u32 %s833, 4
          %s861 = int_to_ptr.vmem [resolvable:$true] %s860
          %863 = dma.vmem_to_hbm [thread:$0]  %s861, 16, %s858, %s831
        $region60: #{tpu_custom_call.1} parent=39 // pred_fallthru
          _
      $region40: #{tpu_custom_call.1} parent=5 // pred_fallthru
        _
      %p864 = scmp.le.s32.totalorder 2, %s20
      // Predicated region
      $region61: #{tpu_custom_call.1} parent=5 // pred_check
        %p865 = pneg %p864
      $region62: #{tpu_custom_call.1} parent=5 // pred_check_branch
        %867 = sbr.rel (%p865) target = $region64
      $region63: #{tpu_custom_call.1} parent=5 // pred_region
        %s868 = ssub.s32 %s20, 2
        // Predicated region
        $region65: #{tpu_custom_call.1} parent=63 // pred_check
          %p869 = pneg %p194
        $region66: #{tpu_custom_call.1} parent=63 // pred_check_branch
          %871 = sbr.rel (%p869) target = $region68
        $region67: #{tpu_custom_call.1} parent=63 // pred_region
          %s872 = sand.u32 %s179, 1
          %s873 = scalar_lea.sflag [#allocation6], %s872
          %s874 = sand.u32 %s179, 1
          %s875 = scalar_lea.vmem [#allocation8], %s874
          %876 = dma.done %s873, 16
        $region68: #{tpu_custom_call.1} parent=63 // pred_fallthru
          _
        // Predicated region
        $region69: #{tpu_custom_call.1} parent=63 // pred_check
          %p877 = pneg %p222
        $region70: #{tpu_custom_call.1} parent=63 // pred_check_branch
          %879 = sbr.rel (%p877) target = $region72
        $region71: #{tpu_custom_call.1} parent=63 // pred_region
          %s880 = sand.u32 %s207, 1
          %s881 = scalar_lea.sflag [#allocation10], %s880
          %s882 = sand.u32 %s207, 1
          %s883 = scalar_lea.vmem [#allocation9], %s882
          %884 = dma.done %s881, 16
        $region72: #{tpu_custom_call.1} parent=63 // pred_fallthru
          _
      $region64: #{tpu_custom_call.1} parent=5 // pred_fallthru
        _
    $region6: #{tpu_custom_call.1} parent=1 // loop_footer
      %s24 = sadd.s32 1, %s20
    $region7: #{tpu_custom_call.1} parent=1 // loop_footer_branch
      %19 = sbr.rel target = $region3
    $region8: #{tpu_custom_call.1} parent=1 // loop_exit
      _
    %885 = vsyncpa [#allocation6], 1
    %s886 = scalar_lea.sflag [#allocation6], 1
    %887 = vsyncpa %s886, 1
    %888 = vsyncpa [#allocation10], 1
    %s889 = scalar_lea.sflag [#allocation10], 1
    %890 = vsyncpa %s889, 1
    %891 = vsyncpa [#allocation7], 1
    %s892 = scalar_lea.sflag [#allocation7], 1
    %893 = vsyncpa %s892, 1

</llo_original>
